<compile_context>
chip_gen: v7x
topology: tpu7x:2x2x1
jax: 0.10.0
libtpu: 0.0.40
codegen_flags: <defaults>
</compile_context>

<pallas_src>
import math

import jax
import jax.numpy as jnp
from jax.experimental import pallas as pl
from jax.experimental.pallas import tpu as pltpu

VMEM_LIMIT = 32 * 1024 * 1024       # explicit scoped-VMEM budget, safe on v5e/v6e/v7x
VMEM_BUDGET = int(VMEM_LIMIT * 0.7) # head-room for compiler-internal scratch


def _round_up(x, m):
    return ((x + m - 1) // m) * m


def _pad2(a, rows, cols):
    return jnp.pad(a, ((0, rows - a.shape[0]), (0, cols - a.shape[1])))


def _fused_a_bytes(tm, tn, Kp, H1):
    # double-buffered inputs + double-buffered outputs + f32 accumulator
    ins = 2 * 4 * (tm * tn + tm * Kp + Kp * tn + tn * H1 + H1)
    outs = 2 * 4 * (tm * tn + tm * H1)
    return ins + outs + 4 * tm * H1


def _fused_b_bytes(tm, tn, H2, Cp):
    ins = 2 * 4 * (tm * tn + tn * H2 + H2 + H2 * Cp + Cp)
    outs = 2 * 4 * (tm * H2 + tm * Cp)
    return ins + outs + 4 * tm * H2


def _pick_tile(Np, Kp, H1, H2, Cp):
    # Largest tile in {512, 256, 128} that (a) divides the 128-aligned node
    # count so no extra padded work is introduced and (b) fits the VMEM budget.
    for t in (512, 256, 128):
        if Np % t != 0:
            continue
        if max(_fused_a_bytes(t, t, Kp, H1), _fused_b_bytes(t, t, H2, Cp)) <= VMEM_BUDGET:
            return t
    return 128


# ---------------------------------------------------------------- Pallas kernels

def _matmul_kernel(a_ref, b_ref, o_ref):
    # support = A @ W (one node-row tile, full K; W stays VMEM-resident).
    o_ref[...] = jnp.dot(a_ref[...], b_ref[...], preferred_element_type=jnp.float32)


def matmul(a, b, tm):
    M, K = a.shape
    _, N = b.shape
    return pl.pallas_call(
        _matmul_kernel,
        out_shape=jax.ShapeDtypeStruct((M, N), jnp.float32),
        grid=(M // tm,),
        in_specs=[pl.BlockSpec((tm, K), lambda i: (i, 0)),
                  pl.BlockSpec((K, N), lambda i: (0, 0))],
        out_specs=pl.BlockSpec((tm, N), lambda i: (i, 0)),
        compiler_params=pltpu.CompilerParams(
            dimension_semantics=("parallel",),
            vmem_limit_bytes=VMEM_LIMIT),
    )(a, b)


def _mask_gc1_kernel(adj_ref, feat_ref, featT_ref, sup_ref, b_ref,
                     mask_ref, h_ref, acc_ref):
    # Fused: adj_mask block + gc1 neighbor-aggregation (+ bias + ReLU).
    j = pl.program_id(1)

    @pl.when(j == 0)
    def _():
        acc_ref[...] = jnp.zeros_like(acc_ref)

    # similarity as a single standard lane-dense GEMM: (tm, K) @ (K, tn)
    sim = jnp.dot(feat_ref[...], featT_ref[...], preferred_element_type=jnp.float32)
    mask = adj_ref[...] * jax.nn.sigmoid(sim)
    mask_ref[...] = mask

    # partial aggregation over this neighbor tile into the f32 accumulator
    acc_ref[...] += jnp.dot(mask, sup_ref[...], preferred_element_type=jnp.float32)

    @pl.when(j == pl.num_programs(1) - 1)
    def _():
        h_ref[...] = jnp.maximum(acc_ref[...] + b_ref[...], 0.0)


def fused_mask_gc1(adj, feat, featT, sup1, b1, tm, tn):
    Np = adj.shape[0]
    Kp = feat.shape[1]
    H1 = sup1.shape[1]
    return pl.pallas_call(
        _mask_gc1_kernel,
        out_shape=(jax.ShapeDtypeStruct((Np, Np), jnp.float32),   # adj_mask
                   jax.ShapeDtypeStruct((Np, H1), jnp.float32)),  # h
        grid=(Np // tm, Np // tn),
        in_specs=[pl.BlockSpec((tm, tn), lambda i, j: (i, j)),    # adj row x nbr tile
                  pl.BlockSpec((tm, Kp), lambda i, j: (i, 0)),    # [output|bi_adj] rows
                  pl.BlockSpec((Kp, tn), lambda i, j: (0, j)),    # its transpose cols
                  pl.BlockSpec((tn, H1), lambda i, j: (j, 0)),    # support (neighbor tile)
                  pl.BlockSpec((1, H1), lambda i, j: (0, 0))],    # bias (resident)
        out_specs=(pl.BlockSpec((tm, tn), lambda i, j: (i, j)),
                   pl.BlockSpec((tm, H1), lambda i, j: (i, 0))),
        scratch_shapes=[pltpu.VMEM((tm, H1), jnp.float32)],
        compiler_params=pltpu.CompilerParams(
            dimension_semantics=("parallel", "arbitrary"),
            vmem_limit_bytes=VMEM_LIMIT),
    )(adj, feat, featT, sup1, b1)


def _gc3_mlp_kernel(mask_ref, sup_ref, b3_ref, wm_ref, bm_ref,
                    emb_ref, out_ref, acc_ref):
    # Fused: gc3 neighbor-aggregation + MLP Linear + LogSoftmax.
    j = pl.program_id(1)

    @pl.when(j == 0)
    def _():
        acc_ref[...] = jnp.zeros_like(acc_ref)

    acc_ref[...] += jnp.dot(mask_ref[...], sup_ref[...],
                            preferred_element_type=jnp.float32)

    @pl.when(j == pl.num_programs(1) - 1)
    def _():
        emb = acc_ref[...] + b3_ref[...]
        emb_ref[...] = emb
        logits = jnp.dot(emb, wm_ref[...], preferred_element_type=jnp.float32) + bm_ref[...]
        m = jnp.max(logits, axis=-1, keepdims=True)
        lse = jnp.log(jnp.sum(jnp.exp(logits - m), axis=-1, keepdims=True)) + m
        out_ref[...] = logits - lse


def fused_gc3_mlp(adj_mask, sup3, b3, wm, bm, tm, tn):
    Np = adj_mask.shape[0]
    H2 = sup3.shape[1]
    Cp = wm.shape[1]
    return pl.pallas_call(
        _gc3_mlp_kernel,
        out_shape=(jax.ShapeDtypeStruct((Np, H2), jnp.float32),   # emb
                   jax.ShapeDtypeStruct((Np, Cp), jnp.float32)),  # log-softmax out
        grid=(Np // tm, Np // tn),
        in_specs=[pl.BlockSpec((tm, tn), lambda i, j: (i, j)),
                  pl.BlockSpec((tn, H2), lambda i, j: (j, 0)),
                  pl.BlockSpec((1, H2), lambda i, j: (0, 0)),
                  pl.BlockSpec((H2, Cp), lambda i, j: (0, 0)),
                  pl.BlockSpec((1, Cp), lambda i, j: (0, 0))],
        out_specs=(pl.BlockSpec((tm, H2), lambda i, j: (i, 0)),
                   pl.BlockSpec((tm, Cp), lambda i, j: (i, 0))),
        scratch_shapes=[pltpu.VMEM((tm, H2), jnp.float32)],
        compiler_params=pltpu.CompilerParams(
            dimension_semantics=("parallel", "arbitrary"),
            vmem_limit_bytes=VMEM_LIMIT),
    )(adj_mask, sup3, b3, wm, bm)


# ---------------------------------------------------------------- model glue

def hlagnn_forward(x, adj, bi_adj, output, params):
    # TODO(synk): GraphConvolution_homo source was not provided with the module;
    # implemented as standard GCN propagation reweighted by the label/structure
    # similarity mask adj * sigmoid([output|bi_adj] @ [output|bi_adj].T).
    N, nfeat = x.shape
    Mb = bi_adj.shape[1]
    C = output.shape[1]
    nhid1 = params["W1"].shape[1]
    nhid2 = params["W3"].shape[1]
    nclass = params["Wm"].shape[1]

    # pad every feature axis to a 128-lane multiple (lane-dense, unmasked vst)
    Np = _round_up(N, 128)
    Fp = _round_up(nfeat, 128)
    Kp = _round_up(C + Mb, 128)
    H1p = _round_up(nhid1, 128)
    H2p = _round_up(nhid2, 128)
    Cp = _round_up(nclass, 128)

    tm = tn = _pick_tile(Np, Kp, H1p, H2p, Cp)

    xp = _pad2(x, Np, Fp)
    adjp = _pad2(adj, Np, Np)
    feat = jnp.concatenate([output, bi_adj], axis=1)     # [output | bi_adj]
    featp = _pad2(feat, Np, Kp)
    featTp = featp.T                                     # wrapper-side layout plumbing

    W1p = _pad2(params["W1"], Fp, H1p)
    b1p = _pad2(params["b1"], 1, H1p)
    W3p = _pad2(params["W3"], H1p, H2p)
    b3p = _pad2(params["b3"], 1, H2p)
    Wmp = _pad2(params["Wm"], H2p, Cp)
    # padded class columns get a huge negative bias so they vanish in log-softmax
    if Cp > nclass:
        bmp = jnp.concatenate(
            [params["bm"], jnp.full((1, Cp - nclass), -1e30, jnp.float32)], axis=1)
    else:
        bmp = params["bm"]

    # support GEMMs (tiny; results must be in HBM for neighbor-axis streaming)
    sup1 = matmul(xp, W1p, tm)

    # fused pass A: adj_mask + gc1 (+ bias + ReLU)
    # TODO(synk): F.dropout implemented as inference-mode identity.
    adj_mask_p, h = fused_mask_gc1(adjp, featp, featTp, sup1, b1p, tm, tn)

    sup3 = matmul(h, W3p, tm)

    # fused pass B: gc3 + MLP Linear + LogSoftmax
    emb_p, out_p = fused_gc3_mlp(adj_mask_p, sup3, b3p, Wmp, bmp, tm, tn)

    out = out_p[:N, :nclass]
    adj_mask = adj_mask_p[:N, :N]
    emb = emb_p[:N, :nhid2]
    return out, adj_mask, emb


def init_params(key, nfeat, nhid1, nhid2, nclass):
    ks = jax.random.split(key, 3)

    def glorot(k, shape):
        lim = math.sqrt(6.0 / (shape[0] + shape[1]))
        return jax.random.uniform(k, shape, jnp.float32, -lim, lim)

    return {
        "W1": glorot(ks[0], (nfeat, nhid1)),
        "b1": jnp.zeros((1, nhid1), jnp.float32),
        "W3": glorot(ks[1], (nhid1, nhid2)),
        "b3": jnp.zeros((1, nhid2), jnp.float32),
        "Wm": glorot(ks[2], (nhid2, nclass)),
        "bm": jnp.zeros((1, nclass), jnp.float32),
    }


# ---------------------------------------------------------------- demo

if __name__ == "__main__":
    key = jax.random.PRNGKey(0)
    N, nfeat, nhid1, nhid2, nclass, Mb = 64, 16, 32, 32, 4, 24

    k1, k2, k3, k4, kp = jax.random.split(key, 5)
    x = jax.random.normal(k1, (N, nfeat), jnp.float32)

    # symmetric-normalized random sparse adjacency with self-loops
    adj = (jax.random.uniform(k2, (N, N)) < 0.1).astype(jnp.float32)
    adj = jnp.maximum(adj, adj.T) + jnp.eye(N, dtype=jnp.float32)
    dinv = 1.0 / jnp.sqrt(adj.sum(axis=1))
    adj = adj * dinv[:, None] * dinv[None, :]

    bi_adj = (jax.random.uniform(k3, (N, Mb)) < 0.2).astype(jnp.float32)
    output = jax.nn.softmax(jax.random.normal(k4, (N, nclass)), axis=1)  # prior preds

    params = init_params(kp, nfeat, nhid1, nhid2, nclass)

    out, adj_mask, emb = hlagnn_forward(x, adj, bi_adj, output, params)
    jax.block_until_ready((out, adj_mask, emb))

    assert out.shape == (N, nclass) and adj_mask.shape == (N, N) and emb.shape == (N, nhid2)

    # pure-JAX reference of the same (assumed) forward semantics
    feat = jnp.concatenate([output, bi_adj], axis=1)
    mask_r = adj * jax.nn.sigmoid(feat @ feat.T)
    h_r = jax.nn.relu(mask_r @ (x @ params["W1"]) + params["b1"])
    emb_r = mask_r @ (h_r @ params["W3"]) + params["b3"]
    logits_r = emb_r @ params["Wm"] + params["bm"]
    out_r = logits_r - jax.scipy.special.logsumexp(logits_r, axis=1, keepdims=True)

    assert jnp.allclose(adj_mask, mask_r, atol=5e-2, rtol=5e-2)
    assert jnp.allclose(emb, emb_r, atol=5e-2, rtol=5e-2)
    assert jnp.allclose(out, out_r, atol=5e-2, rtol=5e-2)

    print("KERNEL_OK")
</pallas_src>

<mosaic_0001>
module attributes {stable_mosaic.version = 11 : i64} {
  func.func @_matmul_kernel(%arg0: i32, %arg1: memref<128x128xf32, #tpu.memory_space<vmem>>, %arg2: memref<128x128xf32, #tpu.memory_space<vmem>>, %arg3: memref<128x128xf32, #tpu.memory_space<vmem>>) attributes {dimension_semantics = [#tpu.dimension_semantics<parallel>], iteration_bounds = array<i64: 1>, scalar_prefetch = 0 : i64, scratch_operands = 0 : i64, tpu.core_type = #tpu.core_type<tc>, window_params = [{transform_indices = @transform_0, window_bounds = array<i64: 128, 128>}, {pipeline_mode = #tpu.pipeline_mode<synchronous>, transform_indices = @transform_1, window_bounds = array<i64: 128, 128>}, {transform_indices = @transform_2, window_bounds = array<i64: 128, 128>}]} {
    %c0 = arith.constant 0 : index
    %c0_0 = arith.constant 0 : index
    %0 = vector.load %arg1[%c0, %c0_0] : memref<128x128xf32, #tpu.memory_space<vmem>>, vector<128x128xf32>
    %c0_1 = arith.constant 0 : index
    %c0_2 = arith.constant 0 : index
    %1 = vector.load %arg2[%c0_1, %c0_2] : memref<128x128xf32, #tpu.memory_space<vmem>>, vector<128x128xf32>
    %cst = arith.constant dense<0.000000e+00> : vector<128x128xf32>
    %2 = tpu.matmul %0, %1, %cst {dimension_numbers = #tpu.dot_dimension_numbers<[1], [0], [0], [1], [0, 0, 1, 1], [], []>} : vector<128x128xf32>, vector<128x128xf32>, vector<128x128xf32> -> vector<128x128xf32>
    %c0_3 = arith.constant 0 : index
    %c0_4 = arith.constant 0 : index
    %3 = vector.load %arg3[%c0_3, %c0_4] : memref<128x128xf32, #tpu.memory_space<vmem>>, vector<128x128xf32>
    tpu.vector_store %arg3[%c0_3, %c0_4], %2 {strides = array<i32>} : memref<128x128xf32, #tpu.memory_space<vmem>>, vector<128x128xf32>,
    return
  }
  func.func @transform_0(%arg0: i32) -> (i32, i32) {
    %c0_i32 = arith.constant 0 : i32
    %c0_i32_0 = arith.constant 0 : i32
    return %arg0, %c0_i32 : i32, i32
  }
  func.func @transform_1(%arg0: i32) -> (i32, i32) {
    %c0_i32 = arith.constant 0 : i32
    %c0_i32_0 = arith.constant 0 : i32
    %c0_i32_1 = arith.constant 0 : i32
    return %c0_i32, %c0_i32_0 : i32, i32
  }
  func.func @transform_2(%arg0: i32) -> (i32, i32) {
    %c0_i32 = arith.constant 0 : i32
    %c0_i32_0 = arith.constant 0 : i32
    return %arg0, %c0_i32 : i32, i32
  }
}

</mosaic_0001>

<llo_original>
// kernel: tpu_custom_call.1
$region0: #{tpu_custom_call.1}
  #allocation0 [shape = 'u32[]', space=smem, size = 0x4, offset = 0x4, fixed_abs, tag = 'smem constant byte address 0x4 - core index']
  #allocation1 [shape = 'u32[144,128]{1,0:T(1,128)}', space=vmem, size = 0x12000, scoped, tag = 'internal scratch']
  %s0 = inlined_call_operand.hbm [shape: f32[128,128], index: 0, kind: input, shape index: {}]
  %s1 = inlined_call_operand.hbm [shape: f32[128,128], index: 1, kind: input, shape index: {}]
  %s2 = inlined_call_operand.hbm [shape: f32[128,128], index: 2, kind: output, shape index: {}]
  %s3 = sld [smem:[#allocation0]]
  $region26: #{tpu_custom_call.1} parent=0
    _
  %s5 = ssub.s32 1, %s3
  %s6 = scalar_select 0, %s5, %s3
  $region1: #{tpu_custom_call.1} parent=0
    #allocation2 [shape = 'u8[65536]{0}', space=vmem, size = 0x10000, scoped, tag = 'input window, operand 0, single buffered']
    #allocation3 [shape = 's32[1]{0}', space=sflag, size = 0x4, scoped, tag = 'scoped memory for tpu_custom_call.1']
    #allocation4 [shape = 's32[1]{0}', space=sflag, size = 0x4, scoped, tag = 'scoped memory for tpu_custom_call.1']
    #allocation5 [shape = 'u8[65536]{0}', space=vmem, size = 0x10000, scoped, tag = 'input window, operand 1, single buffered']
    #allocation6 [shape = 's32[1]{0}', space=sflag, size = 0x4, scoped, tag = 'scoped memory for tpu_custom_call.1']
    #allocation7 [shape = 'u8[65536]{0}', space=vmem, size = 0x10000, scoped, tag = 'output window, operand 0, single buffered']
    %7 = vsyncpa [#allocation3], 0
    %8 = vsyncpa [#allocation6], 0
    %9 = vsyncpa [#allocation4], 0
    // Predicated region
    $region2: #{tpu_custom_call.1} parent=1 // pred_check
      _
    $region3: #{tpu_custom_call.1} parent=1 // pred_check_branch
      %11 = sbr.rel (0) target = $region5
    $region4: #{tpu_custom_call.1} parent=1 // pred_region
      %s13 = ssub.s32 2048, 2048
      %14 = vsyncadd [#allocation3], %s13
      %s15 = sshll.u32 [#allocation2], 4
      %s16 = int_to_ptr.vmem [resolvable:$true] %s15
      %21 = dma.hbm_to_vmem [thread:$0]  %s0, 2048, %s16, [#allocation3], 128, 128, 8
    $region5: #{tpu_custom_call.1} parent=1 // pred_fallthru
      _
    // Predicated region
    $region6: #{tpu_custom_call.1} parent=1 // pred_check
      _
    $region7: #{tpu_custom_call.1} parent=1 // pred_check_branch
      %23 = sbr.rel (0) target = $region9
    $region8: #{tpu_custom_call.1} parent=1 // pred_region
      %s25 = ssub.s32 2048, 2048
      %26 = vsyncadd [#allocation6], %s25
      %s27 = sshll.u32 [#allocation5], 4
      %s28 = int_to_ptr.vmem [resolvable:$true] %s27
      %33 = dma.hbm_to_vmem [thread:$0]  %s1, 2048, %s28, [#allocation6], 128, 128, 8
    $region9: #{tpu_custom_call.1} parent=1 // pred_fallthru
      _
    // Predicated region
    $region10: #{tpu_custom_call.1} parent=1 // pred_check
      _
    $region11: #{tpu_custom_call.1} parent=1 // pred_check_branch
      %35 = sbr.rel (0) target = $region13
    $region12: #{tpu_custom_call.1} parent=1 // pred_region
      %36 = dma.done [#allocation3], 2048
    $region13: #{tpu_custom_call.1} parent=1 // pred_fallthru
      _
    // Predicated region
    $region14: #{tpu_custom_call.1} parent=1 // pred_check
      _
    $region15: #{tpu_custom_call.1} parent=1 // pred_check_branch
      %38 = sbr.rel (0) target = $region17
    $region16: #{tpu_custom_call.1} parent=1 // pred_region
      %39 = dma.done [#allocation6], 2048
    $region17: #{tpu_custom_call.1} parent=1 // pred_fallthru
      _
    %v40 = vld [vmem:[#allocation2] sm:$0xff]
    %v41 = vld [vmem:[#allocation2 + $0x8] sm:$0xff]
    %v42 = vld [vmem:[#allocation2 + $0x10] sm:$0xff]
    %v43 = vld [vmem:[#allocation2 + $0x18] sm:$0xff]
    %v44 = vld [vmem:[#allocation2 + $0x20] sm:$0xff]
    %v45 = vld [vmem:[#allocation2 + $0x28] sm:$0xff]
    %v46 = vld [vmem:[#allocation2 + $0x30] sm:$0xff]
    %v47 = vld [vmem:[#allocation2 + $0x38] sm:$0xff]
    %v48 = vld [vmem:[#allocation2 + $0x40] sm:$0xff]
    %v49 = vld [vmem:[#allocation2 + $0x48] sm:$0xff]
    %v50 = vld [vmem:[#allocation2 + $0x50] sm:$0xff]
    %v51 = vld [vmem:[#allocation2 + $0x58] sm:$0xff]
    %v52 = vld [vmem:[#allocation2 + $0x60] sm:$0xff]
    %v53 = vld [vmem:[#allocation2 + $0x68] sm:$0xff]
    %v54 = vld [vmem:[#allocation2 + $0x70] sm:$0xff]
    %v55 = vld [vmem:[#allocation2 + $0x78] sm:$0xff]
    %v56 = vld [vmem:[#allocation5] sm:$0xff]
    %v57 = vld [vmem:[#allocation5 + $0x8] sm:$0xff]
    %v58 = vld [vmem:[#allocation5 + $0x10] sm:$0xff]
    %v59 = vld [vmem:[#allocation5 + $0x18] sm:$0xff]
    %v60 = vld [vmem:[#allocation5 + $0x20] sm:$0xff]
    %v61 = vld [vmem:[#allocation5 + $0x28] sm:$0xff]
    %v62 = vld [vmem:[#allocation5 + $0x30] sm:$0xff]
    %v63 = vld [vmem:[#allocation5 + $0x38] sm:$0xff]
    %v64 = vld [vmem:[#allocation5 + $0x40] sm:$0xff]
    %v65 = vld [vmem:[#allocation5 + $0x48] sm:$0xff]
    %v66 = vld [vmem:[#allocation5 + $0x50] sm:$0xff]
    %v67 = vld [vmem:[#allocation5 + $0x58] sm:$0xff]
    %v68 = vld [vmem:[#allocation5 + $0x60] sm:$0xff]
    %v69 = vld [vmem:[#allocation5 + $0x68] sm:$0xff]
    %v70 = vld [vmem:[#allocation5 + $0x70] sm:$0xff]
    %v71 = vld [vmem:[#allocation5 + $0x78] sm:$0xff]
    %72 = vmatprep.subr.mxu0 0.0
    %73 = vmatpush1.msra.mxu0 %v56
    %74 = vmatprep.subr.mxu0 0.0
    %75 = vmatpush1.msra.mxu0 %v57
    %76 = vmatprep.subr.mxu0 0.0
    %77 = vmatpush1.msra.mxu0 %v58
    %78 = vmatprep.subr.mxu0 0.0
    %79 = vmatpush1.msra.mxu0 %v59
    %80 = vmatprep.subr.mxu0 0.0
    %81 = vmatpush1.msra.mxu0 %v60
    %82 = vmatprep.subr.mxu0 0.0
    %83 = vmatpush1.msra.mxu0 %v61
    %84 = vmatprep.subr.mxu0 0.0
    %85 = vmatpush1.msra.mxu0 %v62
    %86 = vmatprep.subr.mxu0 0.0
    %87 = vmatpush1.msra.mxu0 %v63
    %88 = vmatprep.subr.mxu0 0.0
    %89 = vmatpush1.msra.mxu0 %v64
    %90 = vmatprep.subr.mxu0 0.0
    %91 = vmatpush1.msra.mxu0 %v65
    %92 = vmatprep.subr.mxu0 0.0
    %93 = vmatpush1.msra.mxu0 %v66
    %94 = vmatprep.subr.mxu0 0.0
    %95 = vmatpush1.msra.mxu0 %v67
    %96 = vmatprep.subr.mxu0 0.0
    %97 = vmatpush1.msra.mxu0 %v68
    %98 = vmatprep.subr.mxu0 0.0
    %99 = vmatpush1.msra.mxu0 %v69
    %100 = vmatprep.subr.mxu0 0.0
    %101 = vmatpush1.msra.mxu0 %v70
    %102 = vmatprep.subr.mxu0 0.0
    %103 = vmatpush1.msra.mxu0 %v71
    %104 = vmatprep.subr.mxu0 0.0
    %105 = vmatpush1.msra.mxu0 0.0
    %106 = vmatprep.subr.mxu0 0.0
    %107 = vmatpush1.msra.mxu0 0.0
    %108 = vmatprep.subr.mxu0 0.0
    %109 = vmatpush1.msra.mxu0 0.0
    %110 = vmatprep.subr.mxu0 0.0
    %111 = vmatpush1.msra.mxu0 0.0
    %112 = vmatprep.subr.mxu0 0.0
    %113 = vmatpush1.msra.mxu0 0.0
    %114 = vmatprep.subr.mxu0 0.0
    %115 = vmatpush1.msra.mxu0 0.0
    %116 = vmatprep.subr.mxu0 0.0
    %117 = vmatpush1.msra.mxu0 0.0
    %118 = vmatprep.subr.mxu0 0.0
    %119 = vmatpush1.msra.mxu0 0.0
    %120 = vmatprep.subr.mxu0 0.0
    %121 = vmatpush1.msra.mxu0 0.0
    %122 = vmatprep.subr.mxu0 0.0
    %123 = vmatpush1.msra.mxu0 0.0
    %124 = vmatprep.subr.mxu0 0.0
    %125 = vmatpush1.msra.mxu0 0.0
    %126 = vmatprep.subr.mxu0 0.0
    %127 = vmatpush1.msra.mxu0 0.0
    %128 = vmatprep.subr.mxu0 0.0
    %129 = vmatpush1.msra.mxu0 0.0
    %130 = vmatprep.subr.mxu0 0.0
    %131 = vmatpush1.msra.mxu0 0.0
    %132 = vmatprep.subr.mxu0 0.0
    %133 = vmatpush1.msra.mxu0 0.0
    %134 = vmatprep.subr.mxu0 0.0
    %135 = vmatpush1.msra.mxu0 0.0
    %136 = vmatprep.mubr.f32.mxu0 0.0
    %137 = vmatmul.mubr.f32.gmra.mrb[0].mxu0 %v40
    %v138 = vpop.f32.mrb[0].mxu0
    %v139 = vadd.f32 0.0, %v138
    %v140 = vpop.f32.mrb[0].mxu0
    %141 = vmatprep.mubr.f32.mxu0 0.0
    %142 = vmatmul.mubr.f32.gmra.mrb[0].mxu0 %v41
    %v143 = vpop.f32.mrb[0].mxu0
    %v144 = vadd.f32 0.0, %v143
    %v145 = vpop.f32.mrb[0].mxu0
    %146 = vmatprep.mubr.f32.mxu0 0.0
    %147 = vmatmul.mubr.f32.gmra.mrb[0].mxu0 %v42
    %v148 = vpop.f32.mrb[0].mxu0
    %v149 = vadd.f32 0.0, %v148
    %v150 = vpop.f32.mrb[0].mxu0
    %151 = vmatprep.mubr.f32.mxu0 0.0
    %152 = vmatmul.mubr.f32.gmra.mrb[0].mxu0 %v43
    %v153 = vpop.f32.mrb[0].mxu0
    %v154 = vadd.f32 0.0, %v153
    %v155 = vpop.f32.mrb[0].mxu0
    %156 = vmatprep.mubr.f32.mxu0 0.0
    %157 = vmatmul.mubr.f32.gmra.mrb[0].mxu0 %v44
    %v158 = vpop.f32.mrb[0].mxu0
    %v159 = vadd.f32 0.0, %v158
    %v160 = vpop.f32.mrb[0].mxu0
    %161 = vmatprep.mubr.f32.mxu0 0.0
    %162 = vmatmul.mubr.f32.gmra.mrb[0].mxu0 %v45
    %v163 = vpop.f32.mrb[0].mxu0
    %v164 = vadd.f32 0.0, %v163
    %v165 = vpop.f32.mrb[0].mxu0
    %166 = vmatprep.mubr.f32.mxu0 0.0
    %167 = vmatmul.mubr.f32.gmra.mrb[0].mxu0 %v46
    %v168 = vpop.f32.mrb[0].mxu0
    %v169 = vadd.f32 0.0, %v168
    %v170 = vpop.f32.mrb[0].mxu0
    %171 = vmatprep.mubr.f32.mxu0 0.0
    %172 = vmatmul.mubr.f32.gmra.mrb[0].mxu0 %v47
    %v173 = vpop.f32.mrb[0].mxu0
    %v174 = vadd.f32 0.0, %v173
    %v175 = vpop.f32.mrb[0].mxu0
    %176 = vmatprep.mubr.f32.mxu0 0.0
    %177 = vmatmul.mubr.f32.gmra.mrb[0].mxu0 %v48
    %v178 = vpop.f32.mrb[0].mxu0
    %v179 = vadd.f32 0.0, %v178
    %v180 = vpop.f32.mrb[0].mxu0
    %181 = vmatprep.mubr.f32.mxu0 0.0
    %182 = vmatmul.mubr.f32.gmra.mrb[0].mxu0 %v49
    %v183 = vpop.f32.mrb[0].mxu0
    %v184 = vadd.f32 0.0, %v183
    %v185 = vpop.f32.mrb[0].mxu0
    %186 = vmatprep.mubr.f32.mxu0 0.0
    %187 = vmatmul.mubr.f32.gmra.mrb[0].mxu0 %v50
    %v188 = vpop.f32.mrb[0].mxu0
    %v189 = vadd.f32 0.0, %v188
    %v190 = vpop.f32.mrb[0].mxu0
    %191 = vmatprep.mubr.f32.mxu0 0.0
    %192 = vmatmul.mubr.f32.gmra.mrb[0].mxu0 %v51
    %v193 = vpop.f32.mrb[0].mxu0
    %v194 = vadd.f32 0.0, %v193
    %v195 = vpop.f32.mrb[0].mxu0
    %196 = vmatprep.mubr.f32.mxu0 0.0
    %197 = vmatmul.mubr.f32.gmra.mrb[0].mxu0 %v52
    %v198 = vpop.f32.mrb[0].mxu0
    %v199 = vadd.f32 0.0, %v198
    %v200 = vpop.f32.mrb[0].mxu0
    %201 = vmatprep.mubr.f32.mxu0 0.0
    %202 = vmatmul.mubr.f32.gmra.mrb[0].mxu0 %v53
    %v203 = vpop.f32.mrb[0].mxu0
    %v204 = vadd.f32 0.0, %v203
    %v205 = vpop.f32.mrb[0].mxu0
    %206 = vmatprep.mubr.f32.mxu0 0.0
    %207 = vmatmul.mubr.f32.gmra.mrb[0].mxu0 %v54
    %v208 = vpop.f32.mrb[0].mxu0
    %v209 = vadd.f32 0.0, %v208
    %v210 = vpop.f32.mrb[0].mxu0
    %211 = vmatprep.mubr.f32.mxu0 0.0
    %212 = vmatmul.mubr.f32.gmra.mrb[0].mxu0 %v55
    %v213 = vpop.f32.mrb[0].mxu0
    %v214 = vadd.f32 0.0, %v213
    %v215 = vpop.f32.mrb[0].mxu0
    %216 = vdwg.mxu0
    %217 = vst [vmem:[#allocation7] sm:$0xff] %v139
    %218 = vst [vmem:[#allocation7 + $0x8] sm:$0xff] %v144
    %219 = vst [vmem:[#allocation7 + $0x10] sm:$0xff] %v149
    %220 = vst [vmem:[#allocation7 + $0x18] sm:$0xff] %v154
    %221 = vst [vmem:[#allocation7 + $0x20] sm:$0xff] %v159
    %222 = vst [vmem:[#allocation7 + $0x28] sm:$0xff] %v164
    %223 = vst [vmem:[#allocation7 + $0x30] sm:$0xff] %v169
    %224 = vst [vmem:[#allocation7 + $0x38] sm:$0xff] %v174
    %225 = vst [vmem:[#allocation7 + $0x40] sm:$0xff] %v179
    %226 = vst [vmem:[#allocation7 + $0x48] sm:$0xff] %v184
    %227 = vst [vmem:[#allocation7 + $0x50] sm:$0xff] %v189
    %228 = vst [vmem:[#allocation7 + $0x58] sm:$0xff] %v194
    %229 = vst [vmem:[#allocation7 + $0x60] sm:$0xff] %v199
    %230 = vst [vmem:[#allocation7 + $0x68] sm:$0xff] %v204
    %231 = vst [vmem:[#allocation7 + $0x70] sm:$0xff] %v209
    %232 = vst [vmem:[#allocation7 + $0x78] sm:$0xff] %v214
    // Predicated region
    $region18: #{tpu_custom_call.1} parent=1 // pred_check
      _
    $region19: #{tpu_custom_call.1} parent=1 // pred_check_branch
      %234 = sbr.rel (0) target = $region21
    $region20: #{tpu_custom_call.1} parent=1 // pred_region
      %s236 = ssub.s32 2048, 2048
      %237 = vsyncadd [#allocation4], %s236
      %s238 = sshll.u32 [#allocation7], 4
      %s239 = int_to_ptr.vmem [resolvable:$true] %s238
      %244 = dma.vmem_to_hbm [thread:$0]  %s239, 2048, %s2, [#allocation4], 128, 128, 8
    $region21: #{tpu_custom_call.1} parent=1 // pred_fallthru
      _
    // Predicated region
    $region22: #{tpu_custom_call.1} parent=1 // pred_check
      _
    $region23: #{tpu_custom_call.1} parent=1 // pred_check_branch
      %246 = sbr.rel (0) target = $region25
    $region24: #{tpu_custom_call.1} parent=1 // pred_region
      %247 = dma.done [#allocation4], 2048
    $region25: #{tpu_custom_call.1} parent=1 // pred_fallthru
      _
    %248 = vsyncpa [#allocation3], 1
    %249 = vsyncpa [#allocation6], 1
    %250 = vsyncpa [#allocation4], 1

</llo_original>
